<compile_context>
chip_gen: v7x
topology: tpu7x:2x2x1
jax: 0.10.0
libtpu: 0.0.40
codegen_flags: <defaults>
</compile_context>

<pallas_src>
import jax
import jax.numpy as jnp
from jax import lax
from jax.experimental import pallas as pl
from jax.experimental.pallas import tpu as pltpu


# ---------------------------------------------------------------------------
# Pallas kernel: whole TarNet forward for one batch tile (transposed layout).
# ---------------------------------------------------------------------------
def tarnet_kernel(
    x_ref, tT_ref,
    w1t_ref, b1_ref,          # feature extractor layer 1 (transposed)
    w2t_ref, b2_ref,          # feature extractor layer 2 (transposed)
    wht_ref, bh_ref,          # concatenated hypothesis first layers
    wf_ref, bf_ref,           # folded (hyp. 2nd layer @ density head) + bde, row-padded
    out_ref,                  # (1, 1, tile_b)
):
    cdt = w1t_ref.dtype       # MXU input dtype (bf16 or f32)
    ewt = b1_ref.dtype        # element-wise (VPU/EUP) dtype (bf16 on v6e/v7x, else f32)

    def elu(z):
        # exp(min(z, 0)) - 1: inactive branch cannot overflow for large z;
        # < 1 ulp difference vs expm1 at these magnitudes.
        return jnp.where(z > 0.0, z, jnp.exp(jnp.minimum(z, 0.0)) - 1.0)

    x_c = x_ref[...].astype(cdt)                           # (TB, d_in), cast in-kernel
    tT = tT_ref[...]                                       # (1, TB), f32

    # feature_extractor layer 1: contract over the feature axis of the
    # natural-layout x block (trans_b form) -> lane-dense (H, TB).
    dn = (((1,), (1,)), ((), ()))
    h = lax.dot_general(w1t_ref[...], x_c, dn,
                        preferred_element_type=jnp.float32)                # (H, TB)
    h = elu(h.astype(ewt) + b1_ref[...])

    # feature_extractor layer 2
    phi = jnp.dot(w2t_ref[...], h.astype(cdt),
                  preferred_element_type=jnp.float32)                      # (R, TB)
    phi = elu(phi.astype(ewt) + b2_ref[...])

    # both hypothesis first layers in one matmul -> (2*Hh, TB)
    h01 = jnp.dot(wht_ref[...], phi.astype(cdt),
                  preferred_element_type=jnp.float32)
    h01 = elu(h01.astype(ewt) + bh_ref[...])

    # hypothesis second layers with density head + its bias folded in.
    # rows 0/1 hold y0/y1; remaining rows are zero padding.  f32 epilogue.
    y01 = jnp.dot(wf_ref[...], h01.astype(cdt),
                  preferred_element_type=jnp.float32) + bf_ref[...]        # (pad, TB)

    y0 = y01[0:1, :]
    y1 = y01[1:2, :]
    out = y0 + tT * (y1 - y0)                                              # (1, TB)
    out_ref[...] = out.reshape(out_ref.shape).astype(out_ref.dtype)


# ---------------------------------------------------------------------------
# Helpers: tile selection and element-wise dtype selection.
# ---------------------------------------------------------------------------
def _auto_tile_b(B):
    cands = [c for c in (4096, 2048, 1024, 512, 256, 128) if B % c == 0]
    if not cands:
        raise ValueError("batch size must be a multiple of 128")
    # prefer an even grid so both v7x TensorCores get work
    for c in cands:
        if (B // c) % 2 == 0:
            return c
    return cands[0]


def _pick_elementwise_dtype(compute_dtype):
    if jnp.dtype(compute_dtype) == jnp.dtype(jnp.float32):
        return jnp.float32
    try:
        kind = jax.devices()[0].device_kind.lower()
    except Exception:
        return jnp.float32
    # v2–v5 have no bf16 VALU/EUP; keep element-wise math in f32 there.
    if any(g in kind for g in ("v2", "v3", "v4", "v5")):
        return jnp.float32
    return jnp.bfloat16


# ---------------------------------------------------------------------------
# Wrapper: offline weight folding/transposing + pallas_call.
# ---------------------------------------------------------------------------
def tarnet_forward(x, t, params, *, tile_b=None, compute_dtype=jnp.bfloat16,
                   elementwise_dtype=None):
    B, d_in = x.shape
    if tile_b is None:
        tile_b = _auto_tile_b(B)
    assert B % tile_b == 0 and tile_b % 128 == 0
    num_tiles = B // tile_b

    (w_fe1, b_fe1, w_fe2, b_fe2,
     w_h0a, b_h0a, w_h0b, b_h0b,
     w_h1a, b_h1a, w_h1b, b_h1b,
     w_de, b_de) = params
    hidden = w_fe1.shape[1]
    rep = w_fe2.shape[1]
    hid_h = w_h0a.shape[1]
    f32 = jnp.float32
    ew_dtype = (_pick_elementwise_dtype(compute_dtype)
                if elementwise_dtype is None else elementwise_dtype)

    # ---- offline weight transforms (exact algebra, done once) ------------
    w1t = w_fe1.T.astype(compute_dtype)                            # (H, d_in)
    b1 = b_fe1.T.astype(ew_dtype)                                  # (H, 1)
    w2t = w_fe2.T.astype(compute_dtype)                            # (R, H)
    b2 = b_fe2.T.astype(ew_dtype)                                  # (R, 1)

    # concat hypothesis first layers -> one (2*Hh, R) matmul
    wht = jnp.concatenate([w_h0a, w_h1a], axis=1).T.astype(compute_dtype)  # (2Hh, R)
    bh = jnp.concatenate([b_h0a, b_h1a], axis=1).T.astype(ew_dtype)        # (2Hh, 1)

    # fold the N=1 density head into the hypothesis second layers, fold the
    # density-head bias into rows 0/1, and pad rows to a full sublane pack
    # (16 for bf16, 8 for f32).
    pad_rows = 16 if jnp.dtype(compute_dtype) == jnp.dtype(jnp.bfloat16) else 8
    w0f = (w_h0b @ w_de).T                                         # (1, Hh)
    w1f = (w_h1b @ w_de).T                                         # (1, Hh)
    wf = jnp.zeros((pad_rows, 2 * hid_h), f32)
    wf = wf.at[0, :hid_h].set(w0f[0]).at[1, hid_h:].set(w1f[0])
    wf = wf.astype(compute_dtype)                                  # (pad, 2Hh)
    bf = jnp.zeros((pad_rows, 1), f32)
    bf = bf.at[0, 0].set((b_h0b @ w_de)[0, 0] + b_de[0, 0])
    bf = bf.at[1, 0].set((b_h1b @ w_de)[0, 0] + b_de[0, 0])        # (pad, 1), f32

    # t transposed wrapper-side (B floats, negligible); x stays in natural
    # (B, d_in) f32 layout and is tiled/cast in-kernel.
    tT = t.T.astype(f32)                                           # (1, B)
    weights = (w1t, b1, w2t, b2, wht, bh, wf, bf)

    x_spec = pl.BlockSpec((tile_b, d_in), lambda i: (i, 0))
    t_spec = pl.BlockSpec((1, tile_b), lambda i: (0, i))
    # constant index_map -> each weight is DMA'd once and revisited.
    weight_specs = [pl.BlockSpec(w.shape, lambda i: (0, 0)) for w in weights]

    flops = 2 * B * sum(int(w.shape[0]) * int(w.shape[1])
                        for w in (w1t, w2t, wht, wf)) + 4 * B
    transcendentals = B * (hidden + rep + 2 * hid_h)
    bytes_accessed = int(x.nbytes + tT.nbytes + 4 * B
                         + sum(int(w.nbytes) for w in weights))

    # rough VMEM need: double-buffered x/t/out blocks + f32 intermediates
    # (plus one cast copy) + double-buffered weights + headroom.
    act_rows = hidden + rep + 2 * hid_h + pad_rows
    vmem_need = (tile_b * ((d_in * 4 + 8) * 2 + act_rows * 4 * 2)
                 + 2 * sum(int(w.nbytes) for w in weights) + (1 << 20))
    compiler_kwargs = dict(dimension_semantics=("parallel",))
    if vmem_need > (12 << 20):
        # raise the scoped-VMEM limit for large tiles (v5e default 16 MiB,
        # v7x 32 MiB); cap comfortably under v7x's 64 MiB physical.
        compiler_kwargs["vmem_limit_bytes"] = int(min(vmem_need * 3 // 2, 48 << 20))

    out3d = pl.pallas_call(
        tarnet_kernel,
        out_shape=jax.ShapeDtypeStruct((num_tiles, 1, tile_b), jnp.float32),
        grid_spec=pltpu.PrefetchScalarGridSpec(
            num_scalar_prefetch=0,
            grid=(num_tiles,),
            in_specs=[x_spec, t_spec] + weight_specs,
            # lane-dense output slab: block == full (1, tile_b) trailing dims.
            out_specs=pl.BlockSpec((1, 1, tile_b), lambda i: (i, 0, 0)),
        ),
        compiler_params=pltpu.CompilerParams(**compiler_kwargs),
        cost_estimate=pl.CostEstimate(
            flops=int(flops),
            transcendentals=int(transcendentals),
            bytes_accessed=bytes_accessed),
    )(x, tT, *weights)

    # (num_tiles, 1, tile_b) -> (B, 1); row-major flatten keeps sample order.
    return out3d.reshape(B, 1)


# ---------------------------------------------------------------------------
# Deterministic parameter construction (PyTorch-style layout) + reference.
# ---------------------------------------------------------------------------
def make_params(key, d_in, hidden, rep, hid_h, out_h):
    keys = jax.random.split(key, 7)
    scale = 0.1

    def lin(k, fan_in, fan_out):
        w = scale * jax.random.normal(k, (fan_in, fan_out), jnp.float32)
        b = jnp.full((1, fan_out), 0.01, jnp.float32)
        return w, b

    w_fe1, b_fe1 = lin(keys[0], d_in, hidden)
    w_fe2, b_fe2 = lin(keys[1], hidden, rep)
    w_h0a, b_h0a = lin(keys[2], rep, hid_h)
    w_h0b, b_h0b = lin(keys[3], hid_h, out_h)
    w_h1a, b_h1a = lin(keys[4], rep, hid_h)
    w_h1b, b_h1b = lin(keys[5], hid_h, out_h)
    w_de, b_de = lin(keys[6], out_h, 1)
    return (w_fe1, b_fe1, w_fe2, b_fe2,
            w_h0a, b_h0a, w_h0b, b_h0b,
            w_h1a, b_h1a, w_h1b, b_h1b,
            w_de, b_de)


def tarnet_ref(x, t, params):
    (w_fe1, b_fe1, w_fe2, b_fe2,
     w_h0a, b_h0a, w_h0b, b_h0b,
     w_h1a, b_h1a, w_h1b, b_h1b,
     w_de, b_de) = params
    elu = jax.nn.elu
    phi = elu(elu(x @ w_fe1 + b_fe1) @ w_fe2 + b_fe2)
    y0 = elu(phi @ w_h0a + b_h0a) @ w_h0b + b_h0b
    y1 = elu(phi @ w_h1a + b_h1a) @ w_h1b + b_h1b
    mixed = (1.0 - t) * y0 + t * y1
    return mixed @ w_de + b_de


if __name__ == "__main__":
    # B=512 -> auto tile_b=256 (multiple of 256, grid=2 => both v7x TCs busy).
    B, d_in, hidden, rep, hid_h, out_h = 512, 16, 32, 32, 32, 16

    key = jax.random.PRNGKey(0)
    k_x, k_t, k_p = jax.random.split(key, 3)
    x = jax.random.normal(k_x, (B, d_in), jnp.float32)
    t = jax.random.bernoulli(k_t, 0.5, (B, 1)).astype(jnp.float32)
    params = make_params(k_p, d_in, hidden, rep, hid_h, out_h)

    ref = tarnet_ref(x, t, params)

    # exact-precision path (f32 MXU inputs, f32 element-wise): validates the
    # algebraic refactor (concat / head-fold / bias-fold / mix rewrite).
    out_f32 = jax.block_until_ready(
        tarnet_forward(x, t, params, compute_dtype=jnp.float32))
    assert out_f32.shape == (B, 1)
    assert jnp.max(jnp.abs(out_f32 - ref)) < 2e-4, "f32 mismatch vs reference"

    # performance path: bf16 MXU inputs, f32 accumulation, bf16 element-wise
    # chain on bf16-capable chips (f32 on v2–v5), f32 epilogue.
    out_bf16 = jax.block_until_ready(
        tarnet_forward(x, t, params, compute_dtype=jnp.bfloat16))
    assert out_bf16.shape == (B, 1)
    assert jnp.max(jnp.abs(out_bf16 - ref)) < 3e-2, "bf16 mismatch vs reference"

    print("KERNEL_OK")
</pallas_src>

<mosaic_0001>
module attributes {stable_mosaic.version = 11 : i64} {
  func.func @tarnet_kernel(%arg0: i32, %arg1: memref<256x16xf32, #tpu.memory_space<vmem>>, %arg2: memref<1x256xf32, #tpu.memory_space<vmem>>, %arg3: memref<32x16xf32, #tpu.memory_space<vmem>>, %arg4: memref<32x1xf32, #tpu.memory_space<vmem>>, %arg5: memref<32x32xf32, #tpu.memory_space<vmem>>, %arg6: memref<32x1xf32, #tpu.memory_space<vmem>>, %arg7: memref<64x32xf32, #tpu.memory_space<vmem>>, %arg8: memref<64x1xf32, #tpu.memory_space<vmem>>, %arg9: memref<8x64xf32, #tpu.memory_space<vmem>>, %arg10: memref<8x1xf32, #tpu.memory_space<vmem>>, %arg11: memref<1x1x256xf32, #tpu.memory_space<vmem>>) attributes {dimension_semantics = [#tpu.dimension_semantics<parallel>], iteration_bounds = array<i64: 2>, scalar_prefetch = 0 : i64, scratch_operands = 0 : i64, tpu.core_type = #tpu.core_type<tc>, window_params = [{transform_indices = @transform_0, window_bounds = array<i64: 256, 16>}, {transform_indices = @transform_1, window_bounds = array<i64: 1, 256>}, {pipeline_mode = #tpu.pipeline_mode<synchronous>, transform_indices = @transform_2, window_bounds = array<i64: 32, 16>}, {pipeline_mode = #tpu.pipeline_mode<synchronous>, transform_indices = @transform_3, window_bounds = array<i64: 32, 1>}, {pipeline_mode = #tpu.pipeline_mode<synchronous>, transform_indices = @transform_4, window_bounds = array<i64: 32, 32>}, {pipeline_mode = #tpu.pipeline_mode<synchronous>, transform_indices = @transform_5, window_bounds = array<i64: 32, 1>}, {pipeline_mode = #tpu.pipeline_mode<synchronous>, transform_indices = @transform_6, window_bounds = array<i64: 64, 32>}, {pipeline_mode = #tpu.pipeline_mode<synchronous>, transform_indices = @transform_7, window_bounds = array<i64: 64, 1>}, {pipeline_mode = #tpu.pipeline_mode<synchronous>, transform_indices = @transform_8, window_bounds = array<i64: 8, 64>}, {pipeline_mode = #tpu.pipeline_mode<synchronous>, transform_indices = @transform_9, window_bounds = array<i64: 8, 1>}, {transform_indices = @transform_10, window_bounds = array<i64: 1, 1, 256>}]} {
    %c0 = arith.constant 0 : index
    %c0_0 = arith.constant 0 : index
    %0 = vector.load %arg1[%c0, %c0_0] : memref<256x16xf32, #tpu.memory_space<vmem>>, vector<256x16xf32>
    %c0_1 = arith.constant 0 : index
    %c0_2 = arith.constant 0 : index
    %1 = vector.load %arg2[%c0_1, %c0_2] : memref<1x256xf32, #tpu.memory_space<vmem>>, vector<1x256xf32>
    %c0_3 = arith.constant 0 : index
    %c0_4 = arith.constant 0 : index
    %2 = vector.load %arg3[%c0_3, %c0_4] : memref<32x16xf32, #tpu.memory_space<vmem>>, vector<32x16xf32>
    %cst = arith.constant dense<0.000000e+00> : vector<32x256xf32>
    %3 = tpu.matmul %2, %0, %cst {dimension_numbers = #tpu.dot_dimension_numbers<[1], [1], [0], [0], [0, 0, 1, 0], [], []>} : vector<32x16xf32>, vector<256x16xf32>, vector<32x256xf32> -> vector<32x256xf32>
    %c0_5 = arith.constant 0 : index
    %c0_6 = arith.constant 0 : index
    %4 = vector.load %arg4[%c0_5, %c0_6] : memref<32x1xf32, #tpu.memory_space<vmem>>, vector<32x1xf32>
    %5 = vector.broadcast %4 : vector<32x1xf32> to vector<32x256xf32>
    %6 = arith.addf %3, %5 : vector<32x256xf32>
    %cst_7 = arith.constant 0.000000e+00 : f32
    %7 = vector.broadcast %cst_7 : f32 to vector<32x256xf32>
    %8 = arith.cmpf ogt, %6, %7 : vector<32x256xf32>
    %cst_8 = arith.constant 0.000000e+00 : f32
    %9 = vector.broadcast %cst_8 : f32 to vector<32x256xf32>
    %10 = arith.minimumf %6, %9 : vector<32x256xf32>
    %11 = math.exp %10 : vector<32x256xf32>
    %cst_9 = arith.constant 1.000000e+00 : f32
    %12 = vector.broadcast %cst_9 : f32 to vector<32x256xf32>
    %13 = arith.subf %11, %12 : vector<32x256xf32>
    %14 = arith.select %8, %6, %13 : vector<32x256xi1>, vector<32x256xf32>
    %c0_10 = arith.constant 0 : index
    %c0_11 = arith.constant 0 : index
    %15 = vector.load %arg5[%c0_10, %c0_11] : memref<32x32xf32, #tpu.memory_space<vmem>>, vector<32x32xf32>
    %cst_12 = arith.constant dense<0.000000e+00> : vector<32x256xf32>
    %16 = tpu.matmul %15, %14, %cst_12 {dimension_numbers = #tpu.dot_dimension_numbers<[1], [0], [0], [1], [0, 0, 1, 1], [], []>} : vector<32x32xf32>, vector<32x256xf32>, vector<32x256xf32> -> vector<32x256xf32>
    %c0_13 = arith.constant 0 : index
    %c0_14 = arith.constant 0 : index
    %17 = vector.load %arg6[%c0_13, %c0_14] : memref<32x1xf32, #tpu.memory_space<vmem>>, vector<32x1xf32>
    %18 = vector.broadcast %17 : vector<32x1xf32> to vector<32x256xf32>
    %19 = arith.addf %16, %18 : vector<32x256xf32>
    %cst_15 = arith.constant 0.000000e+00 : f32
    %20 = vector.broadcast %cst_15 : f32 to vector<32x256xf32>
    %21 = arith.cmpf ogt, %19, %20 : vector<32x256xf32>
    %cst_16 = arith.constant 0.000000e+00 : f32
    %22 = vector.broadcast %cst_16 : f32 to vector<32x256xf32>
    %23 = arith.minimumf %19, %22 : vector<32x256xf32>
    %24 = math.exp %23 : vector<32x256xf32>
    %cst_17 = arith.constant 1.000000e+00 : f32
    %25 = vector.broadcast %cst_17 : f32 to vector<32x256xf32>
    %26 = arith.subf %24, %25 : vector<32x256xf32>
    %27 = arith.select %21, %19, %26 : vector<32x256xi1>, vector<32x256xf32>
    %c0_18 = arith.constant 0 : index
    %c0_19 = arith.constant 0 : index
    %28 = vector.load %arg7[%c0_18, %c0_19] : memref<64x32xf32, #tpu.memory_space<vmem>>, vector<64x32xf32>
    %cst_20 = arith.constant dense<0.000000e+00> : vector<64x256xf32>
    %29 = tpu.matmul %28, %27, %cst_20 {dimension_numbers = #tpu.dot_dimension_numbers<[1], [0], [0], [1], [0, 0, 1, 1], [], []>} : vector<64x32xf32>, vector<32x256xf32>, vector<64x256xf32> -> vector<64x256xf32>
    %c0_21 = arith.constant 0 : index
    %c0_22 = arith.constant 0 : index
    %30 = vector.load %arg8[%c0_21, %c0_22] : memref<64x1xf32, #tpu.memory_space<vmem>>, vector<64x1xf32>
    %31 = vector.broadcast %30 : vector<64x1xf32> to vector<64x256xf32>
    %32 = arith.addf %29, %31 : vector<64x256xf32>
    %cst_23 = arith.constant 0.000000e+00 : f32
    %33 = vector.broadcast %cst_23 : f32 to vector<64x256xf32>
    %34 = arith.cmpf ogt, %32, %33 : vector<64x256xf32>
    %cst_24 = arith.constant 0.000000e+00 : f32
    %35 = vector.broadcast %cst_24 : f32 to vector<64x256xf32>
    %36 = arith.minimumf %32, %35 : vector<64x256xf32>
    %37 = math.exp %36 : vector<64x256xf32>
    %cst_25 = arith.constant 1.000000e+00 : f32
    %38 = vector.broadcast %cst_25 : f32 to vector<64x256xf32>
    %39 = arith.subf %37, %38 : vector<64x256xf32>
    %40 = arith.select %34, %32, %39 : vector<64x256xi1>, vector<64x256xf32>
    %c0_26 = arith.constant 0 : index
    %c0_27 = arith.constant 0 : index
    %41 = vector.load %arg9[%c0_26, %c0_27] : memref<8x64xf32, #tpu.memory_space<vmem>>, vector<8x64xf32>
    %cst_28 = arith.constant dense<0.000000e+00> : vector<8x256xf32>
    %42 = tpu.matmul %41, %40, %cst_28 {dimension_numbers = #tpu.dot_dimension_numbers<[1], [0], [0], [1], [0, 0, 1, 1], [], []>} : vector<8x64xf32>, vector<64x256xf32>, vector<8x256xf32> -> vector<8x256xf32>
    %c0_29 = arith.constant 0 : index
    %c0_30 = arith.constant 0 : index
    %43 = vector.load %arg10[%c0_29, %c0_30] : memref<8x1xf32, #tpu.memory_space<vmem>>, vector<8x1xf32>
    %44 = vector.broadcast %43 : vector<8x1xf32> to vector<8x256xf32>
    %45 = arith.addf %42, %44 : vector<8x256xf32>
    %46 = vector.extract_strided_slice %45 {offsets = [0, 0], sizes = [1, 256], strides = [1, 1]} : vector<8x256xf32> to vector<1x256xf32>
    %47 = vector.extract_strided_slice %45 {offsets = [1, 0], sizes = [1, 256], strides = [1, 1]} : vector<8x256xf32> to vector<1x256xf32>
    %48 = arith.subf %47, %46 : vector<1x256xf32>
    %49 = arith.mulf %1, %48 : vector<1x256xf32>
    %50 = arith.addf %46, %49 : vector<1x256xf32>
    %51 = vector.shape_cast %50 : vector<1x256xf32> to vector<1x1x256xf32>
    %c0_31 = arith.constant 0 : index
    %c0_32 = arith.constant 0 : index
    %c0_33 = arith.constant 0 : index
    %52 = vector.load %arg11[%c0_31, %c0_32, %c0_33] : memref<1x1x256xf32, #tpu.memory_space<vmem>>, vector<1x1x256xf32>
    tpu.vector_store %arg11[%c0_31, %c0_32, %c0_33], %51 {strides = array<i32>} : memref<1x1x256xf32, #tpu.memory_space<vmem>>, vector<1x1x256xf32>,
    return
  }
  func.func @transform_0(%arg0: i32) -> (i32, i32) {
    %c0_i32 = arith.constant 0 : i32
    %c0_i32_0 = arith.constant 0 : i32
    return %arg0, %c0_i32 : i32, i32
  }
  func.func @transform_1(%arg0: i32) -> (i32, i32) {
    %c0_i32 = arith.constant 0 : i32
    %c0_i32_0 = arith.constant 0 : i32
    return %c0_i32, %arg0 : i32, i32
  }
  func.func @transform_2(%arg0: i32) -> (i32, i32) {
    %c0_i32 = arith.constant 0 : i32
    %c0_i32_0 = arith.constant 0 : i32
    %c0_i32_1 = arith.constant 0 : i32
    return %c0_i32, %c0_i32_0 : i32, i32
  }
  func.func @transform_3(%arg0: i32) -> (i32, i32) {
    %c0_i32 = arith.constant 0 : i32
    %c0_i32_0 = arith.constant 0 : i32
    %c0_i32_1 = arith.constant 0 : i32
    return %c0_i32, %c0_i32_0 : i32, i32
  }
  func.func @transform_4(%arg0: i32) -> (i32, i32) {
    %c0_i32 = arith.constant 0 : i32
    %c0_i32_0 = arith.constant 0 : i32
    %c0_i32_1 = arith.constant 0 : i32
    return %c0_i32, %c0_i32_0 : i32, i32
  }
  func.func @transform_5(%arg0: i32) -> (i32, i32) {
    %c0_i32 = arith.constant 0 : i32
    %c0_i32_0 = arith.constant 0 : i32
    %c0_i32_1 = arith.constant 0 : i32
    return %c0_i32, %c0_i32_0 : i32, i32
  }
  func.func @transform_6(%arg0: i32) -> (i32, i32) {
    %c0_i32 = arith.constant 0 : i32
    %c0_i32_0 = arith.constant 0 : i32
    %c0_i32_1 = arith.constant 0 : i32
    return %c0_i32, %c0_i32_0 : i32, i32
  }
  func.func @transform_7(%arg0: i32) -> (i32, i32) {
    %c0_i32 = arith.constant 0 : i32
    %c0_i32_0 = arith.constant 0 : i32
    %c0_i32_1 = arith.constant 0 : i32
    return %c0_i32, %c0_i32_0 : i32, i32
  }
  func.func @transform_8(%arg0: i32) -> (i32, i32) {
    %c0_i32 = arith.constant 0 : i32
    %c0_i32_0 = arith.constant 0 : i32
    %c0_i32_1 = arith.constant 0 : i32
    return %c0_i32, %c0_i32_0 : i32, i32
  }
  func.func @transform_9(%arg0: i32) -> (i32, i32) {
    %c0_i32 = arith.constant 0 : i32
    %c0_i32_0 = arith.constant 0 : i32
    %c0_i32_1 = arith.constant 0 : i32
    return %c0_i32, %c0_i32_0 : i32, i32
  }
  func.func @transform_10(%arg0: i32) -> (i32, i32, i32) {
    %c0_i32 = arith.constant 0 : i32
    %c0_i32_0 = arith.constant 0 : i32
    %c0_i32_1 = arith.constant 0 : i32
    return %arg0, %c0_i32, %c0_i32_0 : i32, i32, i32
  }
}

</mosaic_0001>

<llo_original>
// kernel: tpu_custom_call.1
$region0: #{tpu_custom_call.1}
  #allocation0 [shape = 'u32[]', space=smem, size = 0x4, offset = 0x4, fixed_abs, tag = 'smem constant byte address 0x4 - core index']
  #allocation1 [shape = 'u32[144,128]{1,0:T(1,128)}', space=vmem, size = 0x12000, scoped, tag = 'internal scratch']
  %s0 = inlined_call_operand.vmem [shape: f32[512,16], index: 0, kind: input, shape index: {}]
  %s1 = inlined_call_operand.vmem [shape: f32[1,512], index: 1, kind: input, shape index: {}]
  %s2 = inlined_call_operand.vmem [shape: f32[32,16], index: 2, kind: input, shape index: {}]
  %s3 = inlined_call_operand.vmem [shape: f32[32,1], index: 3, kind: input, shape index: {}]
  %s4 = inlined_call_operand.vmem [shape: f32[32,32], index: 4, kind: input, shape index: {}]
  %s5 = inlined_call_operand.vmem [shape: f32[32,1], index: 5, kind: input, shape index: {}]
  %s6 = inlined_call_operand.vmem [shape: f32[64,32], index: 6, kind: input, shape index: {}]
  %s7 = inlined_call_operand.vmem [shape: f32[64,1], index: 7, kind: input, shape index: {}]
  %s8 = inlined_call_operand.vmem [shape: f32[8,64], index: 8, kind: input, shape index: {}]
  %s9 = inlined_call_operand.vmem [shape: f32[8,1], index: 9, kind: input, shape index: {}]
  %s10 = inlined_call_operand.hbm [shape: f32[2,1,256], index: 10, kind: output, shape index: {}]
  %s11 = sld [smem:[#allocation0]]
  $region73: #{tpu_custom_call.1} parent=0
    _
  %s13 = ssub.s32 1, %s11
  %s14 = scalar_select 0, %s13, %s11
  $region1: #{tpu_custom_call.1} parent=0
    #allocation2 [shape = 'u8[2048]{0}', space=vmem, size = 0x800, scoped, tag = 'output window, operand 0']
    #allocation3 [shape = 's32[2]{0}', space=sflag, size = 0x8, scoped, tag = 'scoped memory for tpu_custom_call.1']
    %15 = vsyncpa [#allocation3], 0
    %s16 = scalar_lea.sflag [#allocation3], 1
    %17 = vsyncpa %s16, 0
    loop: start=0, step=1, limit=4
    $region2: #{tpu_custom_call.1} parent=1 // loop_pre_header
      _
    $region3: #{tpu_custom_call.1} parent=1 // loop_header
      %s19 = sphi 0, %s23
      %p20 = scmp.ge.s32.totalorder %s19, 4
      %s29 = sphi 0, %s31
      %s32 = sphi 0, %s29
      %s33 = sphi 0, %s32
      %s49 = sphi 0, %s33
      %s55 = sphi 0, %s57
      %s58 = sphi 0, %s55
      %s59 = sphi 0, %s58
      %s75 = sphi 0, %s59
      %s79 = sphi 0, %s79
      %s81 = sphi 0, %s79
      %s82 = sphi 0, %s81
      %s96 = sphi 0, %s82
      %s100 = sphi 0, %s100
      %s102 = sphi 0, %s100
      %s103 = sphi 0, %s102
      %s117 = sphi 0, %s103
      %s121 = sphi 0, %s121
      %s123 = sphi 0, %s121
      %s124 = sphi 0, %s123
      %s138 = sphi 0, %s124
      %s142 = sphi 0, %s142
      %s144 = sphi 0, %s142
      %s145 = sphi 0, %s144
      %s159 = sphi 0, %s145
      %s163 = sphi 0, %s163
      %s165 = sphi 0, %s163
      %s166 = sphi 0, %s165
      %s180 = sphi 0, %s166
      %s184 = sphi 0, %s184
      %s186 = sphi 0, %s184
      %s187 = sphi 0, %s186
      %s201 = sphi 0, %s187
      %s205 = sphi 0, %s205
      %s207 = sphi 0, %s205
      %s208 = sphi 0, %s207
      %s222 = sphi 0, %s208
      %s226 = sphi 0, %s226
      %s228 = sphi 0, %s226
      %s229 = sphi 0, %s228
      %s243 = sphi 0, %s229
      %s249 = sphi 0, %s251
      %s252 = sphi 0, %s249
      %s253 = sphi 0, %s252
      %s269 = sphi 0, %s253
    $region4: #{tpu_custom_call.1} parent=1 // loop_header_branch
      %22 = sbr.rel (%p20) target = $region8
    $region5: #{tpu_custom_call.1} parent=1 // loop_body
      %s24 = ssub.s32 %s19, 1
      %s25 = ssub.s32 %s19, 2
      %s26 = sadd.s32 %s19, 1
      %s27 = ssub.s32 %s19, %s26
      %p28 = scmp.eq.s32.totalorder %s27, 0
      %s30 = sadd.s32 %s29, 1
      %s31 = scalar_select %p28, %s29, %s30
      %p34 = pneg %p28
      %p35 = scmp.eq.s32.totalorder %s19, 1
      %p36 = por %p34, %p35
      %p37 = scmp.ne.s32.totalorder %s29, %s32
      %p38 = scmp.eq.s32.totalorder %s19, 0
      %p39 = por %p37, %p38
      %p40 = scmp.ne.s32.totalorder %s29, %s32
      %p41 = scmp.eq.s32.totalorder %s24, 1
      %p42 = por %p40, %p41
      %p43 = scmp.ne.s32.totalorder %s32, %s33
      %p44 = scmp.eq.s32.totalorder %s24, 0
      %p45 = por %p43, %p44
      %p46 = scmp.ne.s32.totalorder %s32, %s33
      %p47 = scmp.eq.s32.totalorder %s25, 1
      %p48 = por %p46, %p47
      %p50 = scmp.ne.s32.totalorder %s33, %s49
      %p51 = scmp.eq.s32.totalorder %s25, 0
      %p52 = por %p50, %p51
      %s53 = ssub.s32 %s19, %s26
      %p54 = scmp.eq.s32.totalorder %s53, 0
      %s56 = sadd.s32 %s55, 1
      %s57 = scalar_select %p54, %s55, %s56
      %p60 = pneg %p54
      %p61 = scmp.eq.s32.totalorder %s19, 1
      %p62 = por %p60, %p61
      %p63 = scmp.ne.s32.totalorder %s55, %s58
      %p64 = scmp.eq.s32.totalorder %s19, 0
      %p65 = por %p63, %p64
      %p66 = scmp.ne.s32.totalorder %s55, %s58
      %p67 = scmp.eq.s32.totalorder %s24, 1
      %p68 = por %p66, %p67
      %p69 = scmp.ne.s32.totalorder %s58, %s59
      %p70 = scmp.eq.s32.totalorder %s24, 0
      %p71 = por %p69, %p70
      %p72 = scmp.ne.s32.totalorder %s58, %s59
      %p73 = scmp.eq.s32.totalorder %s25, 1
      %p74 = por %p72, %p73
      %p76 = scmp.ne.s32.totalorder %s59, %s75
      %p77 = scmp.eq.s32.totalorder %s25, 0
      %p78 = por %p76, %p77
      %s80 = sadd.s32 %s79, 1
      %p83 = scmp.eq.s32.totalorder %s19, 1
      %p84 = scmp.ne.s32.totalorder %s79, %s81
      %p85 = scmp.eq.s32.totalorder %s19, 0
      %p86 = por %p84, %p85
      %p87 = scmp.ne.s32.totalorder %s79, %s81
      %p88 = scmp.eq.s32.totalorder %s24, 1
      %p89 = por %p87, %p88
      %p90 = scmp.ne.s32.totalorder %s81, %s82
      %p91 = scmp.eq.s32.totalorder %s24, 0
      %p92 = por %p90, %p91
      %p93 = scmp.ne.s32.totalorder %s81, %s82
      %p94 = scmp.eq.s32.totalorder %s25, 1
      %p95 = por %p93, %p94
      %p97 = scmp.ne.s32.totalorder %s82, %s96
      %p98 = scmp.eq.s32.totalorder %s25, 0
      %p99 = por %p97, %p98
      %s101 = sadd.s32 %s100, 1
      %p104 = scmp.eq.s32.totalorder %s19, 1
      %p105 = scmp.ne.s32.totalorder %s100, %s102
      %p106 = scmp.eq.s32.totalorder %s19, 0
      %p107 = por %p105, %p106
      %p108 = scmp.ne.s32.totalorder %s100, %s102
      %p109 = scmp.eq.s32.totalorder %s24, 1
      %p110 = por %p108, %p109
      %p111 = scmp.ne.s32.totalorder %s102, %s103
      %p112 = scmp.eq.s32.totalorder %s24, 0
      %p113 = por %p111, %p112
      %p114 = scmp.ne.s32.totalorder %s102, %s103
      %p115 = scmp.eq.s32.totalorder %s25, 1
      %p116 = por %p114, %p115
      %p118 = scmp.ne.s32.totalorder %s103, %s117
      %p119 = scmp.eq.s32.totalorder %s25, 0
      %p120 = por %p118, %p119
      %s122 = sadd.s32 %s121, 1
      %p125 = scmp.eq.s32.totalorder %s19, 1
      %p126 = scmp.ne.s32.totalorder %s121, %s123
      %p127 = scmp.eq.s32.totalorder %s19, 0
      %p128 = por %p126, %p127
      %p129 = scmp.ne.s32.totalorder %s121, %s123
      %p130 = scmp.eq.s32.totalorder %s24, 1
      %p131 = por %p129, %p130
      %p132 = scmp.ne.s32.totalorder %s123, %s124
      %p133 = scmp.eq.s32.totalorder %s24, 0
      %p134 = por %p132, %p133
      %p135 = scmp.ne.s32.totalorder %s123, %s124
      %p136 = scmp.eq.s32.totalorder %s25, 1
      %p137 = por %p135, %p136
      %p139 = scmp.ne.s32.totalorder %s124, %s138
      %p140 = scmp.eq.s32.totalorder %s25, 0
      %p141 = por %p139, %p140
      %s143 = sadd.s32 %s142, 1
      %p146 = scmp.eq.s32.totalorder %s19, 1
      %p147 = scmp.ne.s32.totalorder %s142, %s144
      %p148 = scmp.eq.s32.totalorder %s19, 0
      %p149 = por %p147, %p148
      %p150 = scmp.ne.s32.totalorder %s142, %s144
      %p151 = scmp.eq.s32.totalorder %s24, 1
      %p152 = por %p150, %p151
      %p153 = scmp.ne.s32.totalorder %s144, %s145
      %p154 = scmp.eq.s32.totalorder %s24, 0
      %p155 = por %p153, %p154
      %p156 = scmp.ne.s32.totalorder %s144, %s145
      %p157 = scmp.eq.s32.totalorder %s25, 1
      %p158 = por %p156, %p157
      %p160 = scmp.ne.s32.totalorder %s145, %s159
      %p161 = scmp.eq.s32.totalorder %s25, 0
      %p162 = por %p160, %p161
      %s164 = sadd.s32 %s163, 1
      %p167 = scmp.eq.s32.totalorder %s19, 1
      %p168 = scmp.ne.s32.totalorder %s163, %s165
      %p169 = scmp.eq.s32.totalorder %s19, 0
      %p170 = por %p168, %p169
      %p171 = scmp.ne.s32.totalorder %s163, %s165
      %p172 = scmp.eq.s32.totalorder %s24, 1
      %p173 = por %p171, %p172
      %p174 = scmp.ne.s32.totalorder %s165, %s166
      %p175 = scmp.eq.s32.totalorder %s24, 0
      %p176 = por %p174, %p175
      %p177 = scmp.ne.s32.totalorder %s165, %s166
      %p178 = scmp.eq.s32.totalorder %s25, 1
      %p179 = por %p177, %p178
      %p181 = scmp.ne.s32.totalorder %s166, %s180
      %p182 = scmp.eq.s32.totalorder %s25, 0
      %p183 = por %p181, %p182
      %s185 = sadd.s32 %s184, 1
      %p188 = scmp.eq.s32.totalorder %s19, 1
      %p189 = scmp.ne.s32.totalorder %s184, %s186
      %p190 = scmp.eq.s32.totalorder %s19, 0
      %p191 = por %p189, %p190
      %p192 = scmp.ne.s32.totalorder %s184, %s186
      %p193 = scmp.eq.s32.totalorder %s24, 1
      %p194 = por %p192, %p193
      %p195 = scmp.ne.s32.totalorder %s186, %s187
      %p196 = scmp.eq.s32.totalorder %s24, 0
      %p197 = por %p195, %p196
      %p198 = scmp.ne.s32.totalorder %s186, %s187
      %p199 = scmp.eq.s32.totalorder %s25, 1
      %p200 = por %p198, %p199
      %p202 = scmp.ne.s32.totalorder %s187, %s201
      %p203 = scmp.eq.s32.totalorder %s25, 0
      %p204 = por %p202, %p203
      %s206 = sadd.s32 %s205, 1
      %p209 = scmp.eq.s32.totalorder %s19, 1
      %p210 = scmp.ne.s32.totalorder %s205, %s207
      %p211 = scmp.eq.s32.totalorder %s19, 0
      %p212 = por %p210, %p211
      %p213 = scmp.ne.s32.totalorder %s205, %s207
      %p214 = scmp.eq.s32.totalorder %s24, 1
      %p215 = por %p213, %p214
      %p216 = scmp.ne.s32.totalorder %s207, %s208
      %p217 = scmp.eq.s32.totalorder %s24, 0
      %p218 = por %p216, %p217
      %p219 = scmp.ne.s32.totalorder %s207, %s208
      %p220 = scmp.eq.s32.totalorder %s25, 1
      %p221 = por %p219, %p220
      %p223 = scmp.ne.s32.totalorder %s208, %s222
      %p224 = scmp.eq.s32.totalorder %s25, 0
      %p225 = por %p223, %p224
      %s227 = sadd.s32 %s226, 1
      %p230 = scmp.eq.s32.totalorder %s19, 1
      %p231 = scmp.ne.s32.totalorder %s226, %s228
      %p232 = scmp.eq.s32.totalorder %s19, 0
      %p233 = por %p231, %p232
      %p234 = scmp.ne.s32.totalorder %s226, %s228
      %p235 = scmp.eq.s32.totalorder %s24, 1
      %p236 = por %p234, %p235
      %p237 = scmp.ne.s32.totalorder %s228, %s229
      %p238 = scmp.eq.s32.totalorder %s24, 0
      %p239 = por %p237, %p238
      %p240 = scmp.ne.s32.totalorder %s228, %s229
      %p241 = scmp.eq.s32.totalorder %s25, 1
      %p242 = por %p240, %p241
      %p244 = scmp.ne.s32.totalorder %s229, %s243
      %p245 = scmp.eq.s32.totalorder %s25, 0
      %p246 = por %p244, %p245
      %s247 = ssub.s32 %s19, %s26
      %p248 = scmp.eq.s32.totalorder %s247, 0
      %s250 = sadd.s32 %s249, 1
      %s251 = scalar_select %p248, %s249, %s250
      %p254 = pneg %p248
      %p255 = scmp.eq.s32.totalorder %s19, 1
      %p256 = por %p254, %p255
      %p257 = scmp.ne.s32.totalorder %s249, %s252
      %p258 = scmp.eq.s32.totalorder %s19, 0
      %p259 = por %p257, %p258
      %p260 = scmp.ne.s32.totalorder %s249, %s252
      %p261 = scmp.eq.s32.totalorder %s24, 1
      %p262 = por %p260, %p261
      %p263 = scmp.ne.s32.totalorder %s252, %s253
      %p264 = scmp.eq.s32.totalorder %s24, 0
      %p265 = por %p263, %p264
      %p266 = scmp.ne.s32.totalorder %s252, %s253
      %p267 = scmp.eq.s32.totalorder %s25, 1
      %p268 = por %p266, %p267
      %p270 = scmp.ne.s32.totalorder %s253, %s269
      %p271 = scmp.eq.s32.totalorder %s25, 0
      %p272 = por %p270, %p271
      %p273 = scmp.le.s32.totalorder 1, %s19
      %p274 = scmp.lt.s32.totalorder %s19, 3
      %p275 = pnand %p273, %p274
      %p276 = pneg %p275
      // Predicated region
      $region9: #{tpu_custom_call.1} parent=5 // pred_check
        _
      $region10: #{tpu_custom_call.1} parent=5 // pred_check_branch
        %278 = sbr.rel (%p275) target = $region12
      $region11: #{tpu_custom_call.1} parent=5 // pred_region
        %s279 = ssub.s32 %s19, 1
        // Predicated region
        $region13: #{tpu_custom_call.1} parent=11 // pred_check
          %p280 = pneg %p92
        $region14: #{tpu_custom_call.1} parent=11 // pred_check_branch
          %282 = sbr.rel (%p280) target = $region16
        $region15: #{tpu_custom_call.1} parent=11 // pred_region
          _
        $region16: #{tpu_custom_call.1} parent=11 // pred_fallthru
          _
        // Predicated region
        $region17: #{tpu_custom_call.1} parent=11 // pred_check
          %p283 = pneg %p113
        $region18: #{tpu_custom_call.1} parent=11 // pred_check_branch
          %285 = sbr.rel (%p283) target = $region20
        $region19: #{tpu_custom_call.1} parent=11 // pred_region
          _
        $region20: #{tpu_custom_call.1} parent=11 // pred_fallthru
          _
        // Predicated region
        $region21: #{tpu_custom_call.1} parent=11 // pred_check
          %p286 = pneg %p134
        $region22: #{tpu_custom_call.1} parent=11 // pred_check_branch
          %288 = sbr.rel (%p286) target = $region24
        $region23: #{tpu_custom_call.1} parent=11 // pred_region
          _
        $region24: #{tpu_custom_call.1} parent=11 // pred_fallthru
          _
        // Predicated region
        $region25: #{tpu_custom_call.1} parent=11 // pred_check
          %p289 = pneg %p155
        $region26: #{tpu_custom_call.1} parent=11 // pred_check_branch
          %291 = sbr.rel (%p289) target = $region28
        $region27: #{tpu_custom_call.1} parent=11 // pred_region
          _
        $region28: #{tpu_custom_call.1} parent=11 // pred_fallthru
          _
        // Predicated region
        $region29: #{tpu_custom_call.1} parent=11 // pred_check
          %p292 = pneg %p176
        $region30: #{tpu_custom_call.1} parent=11 // pred_check_branch
          %294 = sbr.rel (%p292) target = $region32
        $region31: #{tpu_custom_call.1} parent=11 // pred_region
          _
        $region32: #{tpu_custom_call.1} parent=11 // pred_fallthru
          _
        // Predicated region
        $region33: #{tpu_custom_call.1} parent=11 // pred_check
          %p295 = pneg %p197
        $region34: #{tpu_custom_call.1} parent=11 // pred_check_branch
          %297 = sbr.rel (%p295) target = $region36
        $region35: #{tpu_custom_call.1} parent=11 // pred_region
          _
        $region36: #{tpu_custom_call.1} parent=11 // pred_fallthru
          _
        // Predicated region
        $region37: #{tpu_custom_call.1} parent=11 // pred_check
          %p298 = pneg %p218
        $region38: #{tpu_custom_call.1} parent=11 // pred_check_branch
          %300 = sbr.rel (%p298) target = $region40
        $region39: #{tpu_custom_call.1} parent=11 // pred_region
          _
        $region40: #{tpu_custom_call.1} parent=11 // pred_fallthru
          _
        // Predicated region
        $region41: #{tpu_custom_call.1} parent=11 // pred_check
          %p301 = pneg %p239
        $region42: #{tpu_custom_call.1} parent=11 // pred_check_branch
          %303 = sbr.rel (%p301) target = $region44
        $region43: #{tpu_custom_call.1} parent=11 // pred_region
          _
        $region44: #{tpu_custom_call.1} parent=11 // pred_fallthru
          _
      $region12: #{tpu_custom_call.1} parent=5 // pred_fallthru
        _
      %p304 = scmp.lt.s32.totalorder %s19, 2
      // Predicated region
      $region45: #{tpu_custom_call.1} parent=5 // pred_check
        %p305 = pneg %p304
      $region46: #{tpu_custom_call.1} parent=5 // pred_check_branch
        %307 = sbr.rel (%p305) target = $region48
      $region47: #{tpu_custom_call.1} parent=5 // pred_region
        // Predicated region
        $region49: #{tpu_custom_call.1} parent=47 // pred_check
          %p308 = pneg %p39
        $region50: #{tpu_custom_call.1} parent=47 // pred_check_branch
          %310 = sbr.rel (%p308) target = $region52
        $region51: #{tpu_custom_call.1} parent=47 // pred_region
          %s311 = smul.u32 32, %s19
          %p312 = scmp.lt.s32.totalorder %s311, 63
          %s313 = scalar_select %p312, %s311, 63
          %s314 = smul.addr %s313, 8
          %s315 = scalar_lea.vmem %s0, %s314
          %s316 = smul.u32 32, %s19
        $region52: #{tpu_custom_call.1} parent=47 // pred_fallthru
          _
        // Predicated region
        $region53: #{tpu_custom_call.1} parent=47 // pred_check
          %p317 = pneg %p65
        $region54: #{tpu_custom_call.1} parent=47 // pred_check_branch
          %319 = sbr.rel (%p317) target = $region56
        $region55: #{tpu_custom_call.1} parent=47 // pred_region
          %s320 = smul.u32 2, %s19
          %p321 = scmp.lt.s32.totalorder %s320, 3
          %s322 = scalar_select %p321, %s320, 3
          %s323 = scalar_lea.vmem %s1, %s322
          %s324 = smul.u32 2, %s19
        $region56: #{tpu_custom_call.1} parent=47 // pred_fallthru
          _
      $region48: #{tpu_custom_call.1} parent=5 // pred_fallthru
        _
      %p325 = scmp.le.s32.totalorder 1, %s19
      %p326 = scmp.lt.s32.totalorder %s19, 3
      %p327 = pnand %p325, %p326
      %p328 = pneg %p327
      // Predicated region
      $region57: #{tpu_custom_call.1} parent=5 // pred_check
        _
      $region58: #{tpu_custom_call.1} parent=5 // pred_check_branch
        %330 = sbr.rel (%p327) target = $region60
      $region59: #{tpu_custom_call.1} parent=5 // pred_region
        %s331 = ssub.s32 %s19, 1
        %s332 = smul.u32 32, %s24
        %p333 = scmp.lt.s32.totalorder %s332, 63
        %s334 = scalar_select %p333, %s332, 63
        %s335 = smul.addr %s334, 8
        %s336 = scalar_lea.vmem %s0, %s335
        %p337 = pneg %p45
        %p338 = pneg %p42
        %s339 = smul.u32 2, %s24
        %p340 = scmp.lt.s32.totalorder %s339, 3
        %s341 = scalar_select %p340, %s339, 3
        %s342 = scalar_lea.vmem %s1, %s341
        %p343 = pneg %p71
        %p344 = pneg %p68
        %p345 = pneg %p92
        %p346 = pneg %p89
        %p347 = pneg %p113
        %p348 = pneg %p110
        %p349 = pneg %p134
        %p350 = pneg %p131
        %p351 = pneg %p155
        %p352 = pneg %p152
        %p353 = pneg %p176
        %p354 = pneg %p173
        %p355 = pneg %p197
        %p356 = pneg %p194
        %p357 = pneg %p218
        %p358 = pneg %p215
        %p359 = pneg %p239
        %p360 = pneg %p236
        %p361 = pneg %p265
        %p362 = pneg %p262
        %s363 = sand.u32 %s252, 1
        %s364 = scalar_lea.sflag [#allocation3], %s363
        %s365 = sand.u32 %s252, 1
        %s366 = smul.addr %s365, 2
        %s367 = scalar_lea.vmem [#allocation2], %s366
        %s368 = smul.u32 32, %s24
        %p369 = scmp.lt.s32.totalorder %s368, 63
        %s370 = scalar_select %p369, %s368, 63
        %s371 = smul.addr %s370, 8
        %s372 = scalar_lea.vmem %s0, %s371
        %s373 = smul.u32 32, %s24
        %s374 = smul.u32 2, %s24
        %p375 = scmp.lt.s32.totalorder %s374, 3
        %s376 = scalar_select %p375, %s374, 3
        %s377 = scalar_lea.vmem %s1, %s376
        %s378 = smul.u32 2, %s24
        %v379 = vld [vmem:[%s372] sm:$0xff]
        %v380 = vld [vmem:[%s372 + $0x8] sm:$0xff]
        %v381 = vld [vmem:[%s372 + $0x10] sm:$0xff]
        %v382 = vld [vmem:[%s372 + $0x18] sm:$0xff]
        %v383 = vld [vmem:[%s372 + $0x20] sm:$0xff]
        %v384 = vld [vmem:[%s372 + $0x28] sm:$0xff]
        %v385 = vld [vmem:[%s372 + $0x30] sm:$0xff]
        %v386 = vld [vmem:[%s372 + $0x38] sm:$0xff]
        %v387 = vld [vmem:[%s372 + $0x40] sm:$0xff]
        %v388 = vld [vmem:[%s372 + $0x48] sm:$0xff]
        %v389 = vld [vmem:[%s372 + $0x50] sm:$0xff]
        %v390 = vld [vmem:[%s372 + $0x58] sm:$0xff]
        %v391 = vld [vmem:[%s372 + $0x60] sm:$0xff]
        %v392 = vld [vmem:[%s372 + $0x68] sm:$0xff]
        %v393 = vld [vmem:[%s372 + $0x70] sm:$0xff]
        %v394 = vld [vmem:[%s372 + $0x78] sm:$0xff]
        %v395 = vld [vmem:[%s372 + $0x80] sm:$0xff]
        %v396 = vld [vmem:[%s372 + $0x88] sm:$0xff]
        %v397 = vld [vmem:[%s372 + $0x90] sm:$0xff]
        %v398 = vld [vmem:[%s372 + $0x98] sm:$0xff]
        %v399 = vld [vmem:[%s372 + $0xa0] sm:$0xff]
        %v400 = vld [vmem:[%s372 + $0xa8] sm:$0xff]
        %v401 = vld [vmem:[%s372 + $0xb0] sm:$0xff]
        %v402 = vld [vmem:[%s372 + $0xb8] sm:$0xff]
        %v403 = vld [vmem:[%s372 + $0xc0] sm:$0xff]
        %v404 = vld [vmem:[%s372 + $0xc8] sm:$0xff]
        %v405 = vld [vmem:[%s372 + $0xd0] sm:$0xff]
        %v406 = vld [vmem:[%s372 + $0xd8] sm:$0xff]
        %v407 = vld [vmem:[%s372 + $0xe0] sm:$0xff]
        %v408 = vld [vmem:[%s372 + $0xe8] sm:$0xff]
        %v409 = vld [vmem:[%s372 + $0xf0] sm:$0xff]
        %v410 = vld [vmem:[%s372 + $0xf8] sm:$0xff]
        %v411 = vld [vmem:[%s377] sm:$0x3]
        %v412 = vld [vmem:[%s2] sm:$0xff]
        %v413 = vld [vmem:[%s2 + $0x8] sm:$0xff]
        %v414 = vld [vmem:[%s2 + $0x10] sm:$0xff]
        %v415 = vld [vmem:[%s2 + $0x18] sm:$0xff]
        %v416 = vld [vmem:[%s3] sm:$0xff]
        %v417 = vld [vmem:[%s3 + $0x8] sm:$0xff]
        %v418 = vld [vmem:[%s3 + $0x10] sm:$0xff]
        %v419 = vld [vmem:[%s3 + $0x18] sm:$0xff]
        %421 = vset.pattern.permute.xlu0 0
        %422 = vperm.xlu0 %421, %v416
        %v423 = vpop.permute.xlu0 %422
        %426 = vset.pattern.permute.xlu0 0
        %427 = vperm.xlu0 %426, %v417
        %v428 = vpop.permute.xlu0 %427
        %431 = vset.pattern.permute.xlu0 0
        %432 = vperm.xlu0 %431, %v418
        %v433 = vpop.permute.xlu0 %432
        %436 = vset.pattern.permute.xlu0 0
        %437 = vperm.xlu0 %436, %v419
        %v438 = vpop.permute.xlu0 %437
        %vm440 = vcmask 130048
        %v442 = vsel %vm440, %v412, 0
        %v445 = vsel %vm440, %v413, 0
        %v448 = vsel %vm440, %v414, 0
        %v451 = vsel %vm440, %v415, 0
        %v454 = vsel %vm440, %v379, 0
        %v457 = vsel %vm440, %v380, 0
        %v460 = vsel %vm440, %v381, 0
        %v463 = vsel %vm440, %v382, 0
        %v466 = vsel %vm440, %v383, 0
        %v469 = vsel %vm440, %v384, 0
        %v472 = vsel %vm440, %v385, 0
        %v475 = vsel %vm440, %v386, 0
        %v478 = vsel %vm440, %v387, 0
        %v481 = vsel %vm440, %v388, 0
        %v484 = vsel %vm440, %v389, 0
        %v487 = vsel %vm440, %v390, 0
        %v490 = vsel %vm440, %v391, 0
        %v493 = vsel %vm440, %v392, 0
        %v496 = vsel %vm440, %v393, 0
        %v499 = vsel %vm440, %v394, 0
        %v502 = vsel %vm440, %v395, 0
        %v505 = vsel %vm440, %v396, 0
        %v508 = vsel %vm440, %v397, 0
        %v511 = vsel %vm440, %v398, 0
        %v514 = vsel %vm440, %v399, 0
        %v517 = vsel %vm440, %v400, 0
        %v520 = vsel %vm440, %v401, 0
        %v523 = vsel %vm440, %v402, 0
        %v526 = vsel %vm440, %v403, 0
        %v529 = vsel %vm440, %v404, 0
        %v532 = vsel %vm440, %v405, 0
        %v535 = vsel %vm440, %v406, 0
        %v538 = vsel %vm440, %v407, 0
        %v541 = vsel %vm440, %v408, 0
        %v544 = vsel %vm440, %v409, 0
        %v547 = vsel %vm440, %v410, 0
        %549 = vmatprep.subr.mxu0 0.0
        %550 = vmatpush1.xpose.msra.mxu0 %v454
        %551 = vmatprep.subr.mxu0 0.0
        %552 = vmatpush1.xpose.msra.mxu0 %v457
        %553 = vmatprep.subr.mxu0 0.0
        %554 = vmatpush1.xpose.msra.mxu0 %v460
        %555 = vmatprep.subr.mxu0 0.0
        %556 = vmatpush1.xpose.msra.mxu0 %v463
        %557 = vmatprep.subr.mxu0 0.0
        %558 = vmatpush1.xpose.msra.mxu0 %v466
        %559 = vmatprep.subr.mxu0 0.0
        %560 = vmatpush1.xpose.msra.mxu0 %v469
        %561 = vmatprep.subr.mxu0 0.0
        %562 = vmatpush1.xpose.msra.mxu0 %v472
        %563 = vmatprep.subr.mxu0 0.0
        %564 = vmatpush1.xpose.msra.mxu0 %v475
        %565 = vmatprep.subr.mxu0 0.0
        %566 = vmatpush1.xpose.msra.mxu0 %v478
        %567 = vmatprep.subr.mxu0 0.0
        %568 = vmatpush1.xpose.msra.mxu0 %v481
        %569 = vmatprep.subr.mxu0 0.0
        %570 = vmatpush1.xpose.msra.mxu0 %v484
        %571 = vmatprep.subr.mxu0 0.0
        %572 = vmatpush1.xpose.msra.mxu0 %v487
        %573 = vmatprep.subr.mxu0 0.0
        %574 = vmatpush1.xpose.msra.mxu0 %v490
        %575 = vmatprep.subr.mxu0 0.0
        %576 = vmatpush1.xpose.msra.mxu0 %v493
        %577 = vmatprep.subr.mxu0 0.0
        %578 = vmatpush1.xpose.msra.mxu0 %v496
        %579 = vmatprep.subr.mxu0 0.0
        %580 = vmatpush1.xpose.msra.mxu0 %v499
        %581 = vmatprep.subr.mxu0 0.0
        %582 = vmatpush1.xpose.msra.mxu0 %v502
        %583 = vmatprep.subr.mxu0 0.0
        %584 = vmatpush1.xpose.msra.mxu0 %v505
        %585 = vmatprep.subr.mxu0 0.0
        %586 = vmatpush1.xpose.msra.mxu0 %v508
        %587 = vmatprep.subr.mxu0 0.0
        %588 = vmatpush1.xpose.msra.mxu0 %v511
        %589 = vmatprep.subr.mxu0 0.0
        %590 = vmatpush1.xpose.msra.mxu0 %v514
        %591 = vmatprep.subr.mxu0 0.0
        %592 = vmatpush1.xpose.msra.mxu0 %v517
        %593 = vmatprep.subr.mxu0 0.0
        %594 = vmatpush1.xpose.msra.mxu0 %v520
        %595 = vmatprep.subr.mxu0 0.0
        %596 = vmatpush1.xpose.msra.mxu0 %v523
        %597 = vmatprep.subr.mxu0 0.0
        %598 = vmatpush1.xpose.msra.mxu0 %v526
        %599 = vmatprep.subr.mxu0 0.0
        %600 = vmatpush1.xpose.msra.mxu0 %v529
        %601 = vmatprep.subr.mxu0 0.0
        %602 = vmatpush1.xpose.msra.mxu0 %v532
        %603 = vmatprep.subr.mxu0 0.0
        %604 = vmatpush1.xpose.msra.mxu0 %v535
        %605 = vmatprep.subr.mxu0 0.0
        %606 = vmatpush1.xpose.msra.mxu0 %v538
        %607 = vmatprep.subr.mxu0 0.0
        %608 = vmatpush1.xpose.msra.mxu0 %v541
        %609 = vmatprep.subr.mxu0 0.0
        %610 = vmatpush1.xpose.msra.mxu0 %v544
        %611 = vmatprep.subr.mxu0 0.0
        %612 = vmatpush1.xpose.msra.mxu0 %v547
        %613 = vmatprep.mubr.f32.mxu0 0.0
        %614 = vmatmul.mubr.f32.gmra.mrb[0].mxu0 %v442
        %v615 = vpop.f32.mrb[0].mxu0
        %v616 = vadd.f32 %v423, %v615
        %v617 = vpop.f32.mrb[0].mxu0
        %v618 = vadd.f32 %v423, %v617
        %619 = vmatprep.mubr.f32.mxu0 0.0
        %620 = vmatmul.mubr.f32.gmra.mrb[0].mxu0 %v445
        %v621 = vpop.f32.mrb[0].mxu0
        %v622 = vadd.f32 %v428, %v621
        %v623 = vpop.f32.mrb[0].mxu0
        %v624 = vadd.f32 %v428, %v623
        %625 = vmatprep.mubr.f32.mxu0 0.0
        %626 = vmatmul.mubr.f32.gmra.mrb[0].mxu0 %v448
        %v627 = vpop.f32.mrb[0].mxu0
        %v628 = vadd.f32 %v433, %v627
        %v629 = vpop.f32.mrb[0].mxu0
        %v630 = vadd.f32 %v433, %v629
        %631 = vmatprep.mubr.f32.mxu0 0.0
        %632 = vmatmul.mubr.f32.gmra.mrb[0].mxu0 %v451
        %v633 = vpop.f32.mrb[0].mxu0
        %v634 = vadd.f32 %v438, %v633
        %v635 = vpop.f32.mrb[0].mxu0
        %v636 = vadd.f32 %v438, %v635
        %637 = vdwg.mxu0
        %vm638 = vcmp.gt.f32.partialorder %v616, 0.0
        %vm639 = vcmp.gt.f32.partialorder %v618, 0.0
        %vm640 = vcmp.gt.f32.partialorder %v622, 0.0
        %vm641 = vcmp.gt.f32.partialorder %v624, 0.0
        %vm642 = vcmp.gt.f32.partialorder %v628, 0.0
        %vm643 = vcmp.gt.f32.partialorder %v630, 0.0
        %vm644 = vcmp.gt.f32.partialorder %v634, 0.0
        %vm645 = vcmp.gt.f32.partialorder %v636, 0.0
        %v646 = vmin.f32 %v616, 0.0
        %v647 = vmin.f32 %v618, 0.0
        %v648 = vmin.f32 %v622, 0.0
        %v649 = vmin.f32 %v624, 0.0
        %v650 = vmin.f32 %v628, 0.0
        %v651 = vmin.f32 %v630, 0.0
        %v652 = vmin.f32 %v634, 0.0
        %v653 = vmin.f32 %v636, 0.0
        %v654 = vmul.f32 %v646, 1.442695
        %v655 = vpow.pop %v654
        %v656 = vmul.f32 %v647, 1.442695
        %v657 = vpow.pop %v656
        %v658 = vmul.f32 %v648, 1.442695
        %v659 = vpow.pop %v658
        %v660 = vmul.f32 %v649, 1.442695
        %v661 = vpow.pop %v660
        %v662 = vmul.f32 %v650, 1.442695
        %v663 = vpow.pop %v662
        %v664 = vmul.f32 %v651, 1.442695
        %v665 = vpow.pop %v664
        %v666 = vmul.f32 %v652, 1.442695
        %v667 = vpow.pop %v666
        %v668 = vmul.f32 %v653, 1.442695
        %v669 = vpow.pop %v668
        %v670 = vsub.f32 %v655, 1.0
        %v671 = vsub.f32 %v657, 1.0
        %v672 = vsub.f32 %v659, 1.0
        %v673 = vsub.f32 %v661, 1.0
        %v674 = vsub.f32 %v663, 1.0
        %v675 = vsub.f32 %v665, 1.0
        %v676 = vsub.f32 %v667, 1.0
        %v677 = vsub.f32 %v669, 1.0
        %v678 = vsel %vm638, %v616, %v670
        %v679 = vsel %vm639, %v618, %v671
        %v680 = vsel %vm640, %v622, %v672
        %v681 = vsel %vm641, %v624, %v673
        %v682 = vsel %vm642, %v628, %v674
        %v683 = vsel %vm643, %v630, %v675
        %v684 = vsel %vm644, %v634, %v676
        %v685 = vsel %vm645, %v636, %v677
        %v686 = vld [vmem:[%s4] sm:$0xff]
        %v687 = vld [vmem:[%s4 + $0x8] sm:$0xff]
        %v688 = vld [vmem:[%s4 + $0x10] sm:$0xff]
        %v689 = vld [vmem:[%s4 + $0x18] sm:$0xff]
        %v690 = vld [vmem:[%s5] sm:$0xff]
        %v691 = vld [vmem:[%s5 + $0x8] sm:$0xff]
        %v692 = vld [vmem:[%s5 + $0x10] sm:$0xff]
        %v693 = vld [vmem:[%s5 + $0x18] sm:$0xff]
        %695 = vset.pattern.permute.xlu0 0
        %696 = vperm.xlu0 %695, %v690
        %v697 = vpop.permute.xlu0 %696
        %700 = vset.pattern.permute.xlu0 0
        %701 = vperm.xlu0 %700, %v691
        %v702 = vpop.permute.xlu0 %701
        %705 = vset.pattern.permute.xlu0 0
        %706 = vperm.xlu0 %705, %v692
        %v707 = vpop.permute.xlu0 %706
        %710 = vset.pattern.permute.xlu0 0
        %711 = vperm.xlu0 %710, %v693
        %v712 = vpop.permute.xlu0 %711
        %vm714 = vcmask 261120
        %v716 = vsel %vm714, %v686, 0
        %v719 = vsel %vm714, %v687, 0
        %v722 = vsel %vm714, %v688, 0
        %v725 = vsel %vm714, %v689, 0
        %727 = vmatprep.subr.mxu0 %v679
        %728 = vmatpush1.msra.mxu0 %v678
        %729 = vmatprep.subr.mxu0 %v681
        %730 = vmatpush1.msra.mxu0 %v680
        %731 = vmatprep.subr.mxu0 %v683
        %732 = vmatpush1.msra.mxu0 %v682
        %733 = vmatprep.subr.mxu0 %v685
        %734 = vmatpush1.msra.mxu0 %v684
        %735 = vmatprep.subr.mxu0 0.0
        %736 = vmatpush1.msra.mxu0 0.0
        %737 = vmatprep.subr.mxu0 0.0
        %738 = vmatpush1.msra.mxu0 0.0
        %739 = vmatprep.subr.mxu0 0.0
        %740 = vmatpush1.msra.mxu0 0.0
        %741 = vmatprep.subr.mxu0 0.0
        %742 = vmatpush1.msra.mxu0 0.0
        %743 = vmatprep.subr.mxu0 0.0
        %744 = vmatpush1.msra.mxu0 0.0
        %745 = vmatprep.subr.mxu0 0.0
        %746 = vmatpush1.msra.mxu0 0.0
        %747 = vmatprep.subr.mxu0 0.0
        %748 = vmatpush1.msra.mxu0 0.0
        %749 = vmatprep.subr.mxu0 0.0
        %750 = vmatpush1.msra.mxu0 0.0
        %751 = vmatprep.subr.mxu0 0.0
        %752 = vmatpush1.msra.mxu0 0.0
        %753 = vmatprep.subr.mxu0 0.0
        %754 = vmatpush1.msra.mxu0 0.0
        %755 = vmatprep.subr.mxu0 0.0
        %756 = vmatpush1.msra.mxu0 0.0
        %757 = vmatprep.subr.mxu0 0.0
        %758 = vmatpush1.msra.mxu0 0.0
        %759 = vmatprep.subr.mxu0 0.0
        %760 = vmatpush1.msra.mxu0 0.0
        %761 = vmatprep.subr.mxu0 0.0
        %762 = vmatpush1.msra.mxu0 0.0
        %763 = vmatprep.subr.mxu0 0.0
        %764 = vmatpush1.msra.mxu0 0.0
        %765 = vmatprep.subr.mxu0 0.0
        %766 = vmatpush1.msra.mxu0 0.0
        %767 = vmatprep.subr.mxu0 0.0
        %768 = vmatpush1.msra.mxu0 0.0
        %769 = vmatprep.subr.mxu0 0.0
        %770 = vmatpush1.msra.mxu0 0.0
        %771 = vmatprep.subr.mxu0 0.0
        %772 = vmatpush1.msra.mxu0 0.0
        %773 = vmatprep.subr.mxu0 0.0
        %774 = vmatpush1.msra.mxu0 0.0
        %775 = vmatprep.subr.mxu0 0.0
        %776 = vmatpush1.msra.mxu0 0.0
        %777 = vmatprep.subr.mxu0 0.0
        %778 = vmatpush1.msra.mxu0 0.0
        %779 = vmatprep.subr.mxu0 0.0
        %780 = vmatpush1.msra.mxu0 0.0
        %781 = vmatprep.subr.mxu0 0.0
        %782 = vmatpush1.msra.mxu0 0.0
        %783 = vmatprep.subr.mxu0 0.0
        %784 = vmatpush1.msra.mxu0 0.0
        %785 = vmatprep.subr.mxu0 0.0
        %786 = vmatpush1.msra.mxu0 0.0
        %787 = vmatprep.subr.mxu0 0.0
        %788 = vmatpush1.msra.mxu0 0.0
        %789 = vmatprep.subr.mxu0 0.0
        %790 = vmatpush1.msra.mxu0 0.0
        %791 = vmatprep.mubr.f32.mxu0 0.0
        %792 = vmatmul.mubr.f32.gmra.mrb[0].mxu0 %v716
        %v793 = vpop.f32.mrb[0].mxu0
        %v794 = vadd.f32 %v697, %v793
        %v795 = vpop.f32.mrb[0].mxu0
        %v796 = vadd.f32 %v697, %v795
        %797 = vmatprep.mubr.f32.mxu0 0.0
        %798 = vmatmul.mubr.f32.gmra.mrb[0].mxu0 %v719
        %v799 = vpop.f32.mrb[0].mxu0
        %v800 = vadd.f32 %v702, %v799
        %v801 = vpop.f32.mrb[0].mxu0
        %v802 = vadd.f32 %v702, %v801
        %803 = vmatprep.mubr.f32.mxu0 0.0
        %804 = vmatmul.mubr.f32.gmra.mrb[0].mxu0 %v722
        %v805 = vpop.f32.mrb[0].mxu0
        %v806 = vadd.f32 %v707, %v805
        %v807 = vpop.f32.mrb[0].mxu0
        %v808 = vadd.f32 %v707, %v807
        %809 = vmatprep.mubr.f32.mxu0 0.0
        %810 = vmatmul.mubr.f32.gmra.mrb[0].mxu0 %v725
        %v811 = vpop.f32.mrb[0].mxu0
        %v812 = vadd.f32 %v712, %v811
        %v813 = vpop.f32.mrb[0].mxu0
        %v814 = vadd.f32 %v712, %v813
        %815 = vdwg.mxu0
        %vm816 = vcmp.gt.f32.partialorder %v794, 0.0
        %vm817 = vcmp.gt.f32.partialorder %v796, 0.0
        %vm818 = vcmp.gt.f32.partialorder %v800, 0.0
        %vm819 = vcmp.gt.f32.partialorder %v802, 0.0
        %vm820 = vcmp.gt.f32.partialorder %v806, 0.0
        %vm821 = vcmp.gt.f32.partialorder %v808, 0.0
        %vm822 = vcmp.gt.f32.partialorder %v812, 0.0
        %vm823 = vcmp.gt.f32.partialorder %v814, 0.0
        %v824 = vmin.f32 %v794, 0.0
        %v825 = vmin.f32 %v796, 0.0
        %v826 = vmin.f32 %v800, 0.0
        %v827 = vmin.f32 %v802, 0.0
        %v828 = vmin.f32 %v806, 0.0
        %v829 = vmin.f32 %v808, 0.0
        %v830 = vmin.f32 %v812, 0.0
        %v831 = vmin.f32 %v814, 0.0
        %v832 = vmul.f32 %v824, 1.442695
        %v833 = vpow.pop %v832
        %v834 = vmul.f32 %v825, 1.442695
        %v835 = vpow.pop %v834
        %v836 = vmul.f32 %v826, 1.442695
        %v837 = vpow.pop %v836
        %v838 = vmul.f32 %v827, 1.442695
        %v839 = vpow.pop %v838
        %v840 = vmul.f32 %v828, 1.442695
        %v841 = vpow.pop %v840
        %v842 = vmul.f32 %v829, 1.442695
        %v843 = vpow.pop %v842
        %v844 = vmul.f32 %v830, 1.442695
        %v845 = vpow.pop %v844
        %v846 = vmul.f32 %v831, 1.442695
        %v847 = vpow.pop %v846
        %v848 = vsub.f32 %v833, 1.0
        %v849 = vsub.f32 %v835, 1.0
        %v850 = vsub.f32 %v837, 1.0
        %v851 = vsub.f32 %v839, 1.0
        %v852 = vsub.f32 %v841, 1.0
        %v853 = vsub.f32 %v843, 1.0
        %v854 = vsub.f32 %v845, 1.0
        %v855 = vsub.f32 %v847, 1.0
        %v856 = vsel %vm816, %v794, %v848
        %v857 = vsel %vm817, %v796, %v849
        %v858 = vsel %vm818, %v800, %v850
        %v859 = vsel %vm819, %v802, %v851
        %v860 = vsel %vm820, %v806, %v852
        %v861 = vsel %vm821, %v808, %v853
        %v862 = vsel %vm822, %v812, %v854
        %v863 = vsel %vm823, %v814, %v855
        %v864 = vld [vmem:[%s6] sm:$0xff]
        %v865 = vld [vmem:[%s6 + $0x8] sm:$0xff]
        %v866 = vld [vmem:[%s6 + $0x10] sm:$0xff]
        %v867 = vld [vmem:[%s6 + $0x18] sm:$0xff]
        %v868 = vld [vmem:[%s6 + $0x20] sm:$0xff]
        %v869 = vld [vmem:[%s6 + $0x28] sm:$0xff]
        %v870 = vld [vmem:[%s6 + $0x30] sm:$0xff]
        %v871 = vld [vmem:[%s6 + $0x38] sm:$0xff]
        %v872 = vld [vmem:[%s7] sm:$0xff]
        %v873 = vld [vmem:[%s7 + $0x8] sm:$0xff]
        %v874 = vld [vmem:[%s7 + $0x10] sm:$0xff]
        %v875 = vld [vmem:[%s7 + $0x18] sm:$0xff]
        %v876 = vld [vmem:[%s7 + $0x20] sm:$0xff]
        %v877 = vld [vmem:[%s7 + $0x28] sm:$0xff]
        %v878 = vld [vmem:[%s7 + $0x30] sm:$0xff]
        %v879 = vld [vmem:[%s7 + $0x38] sm:$0xff]
        %881 = vset.pattern.permute.xlu0 0
        %882 = vperm.xlu0 %881, %v872
        %v883 = vpop.permute.xlu0 %882
        %886 = vset.pattern.permute.xlu0 0
        %887 = vperm.xlu0 %886, %v873
        %v888 = vpop.permute.xlu0 %887
        %891 = vset.pattern.permute.xlu0 0
        %892 = vperm.xlu0 %891, %v874
        %v893 = vpop.permute.xlu0 %892
        %896 = vset.pattern.permute.xlu0 0
        %897 = vperm.xlu0 %896, %v875
        %v898 = vpop.permute.xlu0 %897
        %901 = vset.pattern.permute.xlu0 0
        %902 = vperm.xlu0 %901, %v876
        %v903 = vpop.permute.xlu0 %902
        %906 = vset.pattern.permute.xlu0 0
        %907 = vperm.xlu0 %906, %v877
        %v908 = vpop.permute.xlu0 %907
        %911 = vset.pattern.permute.xlu0 0
        %912 = vperm.xlu0 %911, %v878
        %v913 = vpop.permute.xlu0 %912
        %916 = vset.pattern.permute.xlu0 0
        %917 = vperm.xlu0 %916, %v879
        %v918 = vpop.permute.xlu0 %917
        %v921 = vsel %vm714, %v864, 0
        %v924 = vsel %vm714, %v865, 0
        %v927 = vsel %vm714, %v866, 0
        %v930 = vsel %vm714, %v867, 0
        %v933 = vsel %vm714, %v868, 0
        %v936 = vsel %vm714, %v869, 0
        %v939 = vsel %vm714, %v870, 0
        %v942 = vsel %vm714, %v871, 0
        %944 = vmatprep.subr.mxu0 %v857
        %945 = vmatpush1.msra.mxu0 %v856
        %946 = vmatprep.subr.mxu0 %v859
        %947 = vmatpush1.msra.mxu0 %v858
        %948 = vmatprep.subr.mxu0 %v861
        %949 = vmatpush1.msra.mxu0 %v860
        %950 = vmatprep.subr.mxu0 %v863
        %951 = vmatpush1.msra.mxu0 %v862
        %952 = vmatprep.subr.mxu0 0.0
        %953 = vmatpush1.msra.mxu0 0.0
        %954 = vmatprep.subr.mxu0 0.0
        %955 = vmatpush1.msra.mxu0 0.0
        %956 = vmatprep.subr.mxu0 0.0
        %957 = vmatpush1.msra.mxu0 0.0
        %958 = vmatprep.subr.mxu0 0.0
        %959 = vmatpush1.msra.mxu0 0.0
        %960 = vmatprep.subr.mxu0 0.0
        %961 = vmatpush1.msra.mxu0 0.0
        %962 = vmatprep.subr.mxu0 0.0
        %963 = vmatpush1.msra.mxu0 0.0
        %964 = vmatprep.subr.mxu0 0.0
        %965 = vmatpush1.msra.mxu0 0.0
        %966 = vmatprep.subr.mxu0 0.0
        %967 = vmatpush1.msra.mxu0 0.0
        %968 = vmatprep.subr.mxu0 0.0
        %969 = vmatpush1.msra.mxu0 0.0
        %970 = vmatprep.subr.mxu0 0.0
        %971 = vmatpush1.msra.mxu0 0.0
        %972 = vmatprep.subr.mxu0 0.0
        %973 = vmatpush1.msra.mxu0 0.0
        %974 = vmatprep.subr.mxu0 0.0
        %975 = vmatpush1.msra.mxu0 0.0
        %976 = vmatprep.subr.mxu0 0.0
        %977 = vmatpush1.msra.mxu0 0.0
        %978 = vmatprep.subr.mxu0 0.0
        %979 = vmatpush1.msra.mxu0 0.0
        %980 = vmatprep.subr.mxu0 0.0
        %981 = vmatpush1.msra.mxu0 0.0
        %982 = vmatprep.subr.mxu0 0.0
        %983 = vmatpush1.msra.mxu0 0.0
        %984 = vmatprep.subr.mxu0 0.0
        %985 = vmatpush1.msra.mxu0 0.0
        %986 = vmatprep.subr.mxu0 0.0
        %987 = vmatpush1.msra.mxu0 0.0
        %988 = vmatprep.subr.mxu0 0.0
        %989 = vmatpush1.msra.mxu0 0.0
        %990 = vmatprep.subr.mxu0 0.0
        %991 = vmatpush1.msra.mxu0 0.0
        %992 = vmatprep.subr.mxu0 0.0
        %993 = vmatpush1.msra.mxu0 0.0
        %994 = vmatprep.subr.mxu0 0.0
        %995 = vmatpush1.msra.mxu0 0.0
        %996 = vmatprep.subr.mxu0 0.0
        %997 = vmatpush1.msra.mxu0 0.0
        %998 = vmatprep.subr.mxu0 0.0
        %999 = vmatpush1.msra.mxu0 0.0
        %1000 = vmatprep.subr.mxu0 0.0
        %1001 = vmatpush1.msra.mxu0 0.0
        %1002 = vmatprep.subr.mxu0 0.0
        %1003 = vmatpush1.msra.mxu0 0.0
        %1004 = vmatprep.subr.mxu0 0.0
        %1005 = vmatpush1.msra.mxu0 0.0
        %1006 = vmatprep.subr.mxu0 0.0
        %1007 = vmatpush1.msra.mxu0 0.0
        %1008 = vmatprep.mubr.f32.mxu0 0.0
        %1009 = vmatmul.mubr.f32.gmra.mrb[0].mxu0 %v921
        %v1010 = vpop.f32.mrb[0].mxu0
        %v1011 = vadd.f32 %v883, %v1010
        %v1012 = vpop.f32.mrb[0].mxu0
        %v1013 = vadd.f32 %v883, %v1012
        %1014 = vmatprep.mubr.f32.mxu0 0.0
        %1015 = vmatmul.mubr.f32.gmra.mrb[0].mxu0 %v924
        %v1016 = vpop.f32.mrb[0].mxu0
        %v1017 = vadd.f32 %v888, %v1016
        %v1018 = vpop.f32.mrb[0].mxu0
        %v1019 = vadd.f32 %v888, %v1018
        %1020 = vmatprep.mubr.f32.mxu0 0.0
        %1021 = vmatmul.mubr.f32.gmra.mrb[0].mxu0 %v927
        %v1022 = vpop.f32.mrb[0].mxu0
        %v1023 = vadd.f32 %v893, %v1022
        %v1024 = vpop.f32.mrb[0].mxu0
        %v1025 = vadd.f32 %v893, %v1024
        %1026 = vmatprep.mubr.f32.mxu0 0.0
        %1027 = vmatmul.mubr.f32.gmra.mrb[0].mxu0 %v930
        %v1028 = vpop.f32.mrb[0].mxu0
        %v1029 = vadd.f32 %v898, %v1028
        %v1030 = vpop.f32.mrb[0].mxu0
        %v1031 = vadd.f32 %v898, %v1030
        %1032 = vmatprep.mubr.f32.mxu0 0.0
        %1033 = vmatmul.mubr.f32.gmra.mrb[0].mxu0 %v933
        %v1034 = vpop.f32.mrb[0].mxu0
        %v1035 = vadd.f32 %v903, %v1034
        %v1036 = vpop.f32.mrb[0].mxu0
        %v1037 = vadd.f32 %v903, %v1036
        %1038 = vmatprep.mubr.f32.mxu0 0.0
        %1039 = vmatmul.mubr.f32.gmra.mrb[0].mxu0 %v936
        %v1040 = vpop.f32.mrb[0].mxu0
        %v1041 = vadd.f32 %v908, %v1040
        %v1042 = vpop.f32.mrb[0].mxu0
        %v1043 = vadd.f32 %v908, %v1042
        %1044 = vmatprep.mubr.f32.mxu0 0.0
        %1045 = vmatmul.mubr.f32.gmra.mrb[0].mxu0 %v939
        %v1046 = vpop.f32.mrb[0].mxu0
        %v1047 = vadd.f32 %v913, %v1046
        %v1048 = vpop.f32.mrb[0].mxu0
        %v1049 = vadd.f32 %v913, %v1048
        %1050 = vmatprep.mubr.f32.mxu0 0.0
        %1051 = vmatmul.mubr.f32.gmra.mrb[0].mxu0 %v942
        %v1052 = vpop.f32.mrb[0].mxu0
        %v1053 = vadd.f32 %v918, %v1052
        %v1054 = vpop.f32.mrb[0].mxu0
        %v1055 = vadd.f32 %v918, %v1054
        %1056 = vdwg.mxu0
        %vm1057 = vcmp.gt.f32.partialorder %v1011, 0.0
        %vm1058 = vcmp.gt.f32.partialorder %v1013, 0.0
        %vm1059 = vcmp.gt.f32.partialorder %v1017, 0.0
        %vm1060 = vcmp.gt.f32.partialorder %v1019, 0.0
        %vm1061 = vcmp.gt.f32.partialorder %v1023, 0.0
        %vm1062 = vcmp.gt.f32.partialorder %v1025, 0.0
        %vm1063 = vcmp.gt.f32.partialorder %v1029, 0.0
        %vm1064 = vcmp.gt.f32.partialorder %v1031, 0.0
        %vm1065 = vcmp.gt.f32.partialorder %v1035, 0.0
        %vm1066 = vcmp.gt.f32.partialorder %v1037, 0.0
        %vm1067 = vcmp.gt.f32.partialorder %v1041, 0.0
        %vm1068 = vcmp.gt.f32.partialorder %v1043, 0.0
        %vm1069 = vcmp.gt.f32.partialorder %v1047, 0.0
        %vm1070 = vcmp.gt.f32.partialorder %v1049, 0.0
        %vm1071 = vcmp.gt.f32.partialorder %v1053, 0.0
        %vm1072 = vcmp.gt.f32.partialorder %v1055, 0.0
        %v1073 = vmin.f32 %v1011, 0.0
        %v1074 = vmin.f32 %v1013, 0.0
        %v1075 = vmin.f32 %v1017, 0.0
        %v1076 = vmin.f32 %v1019, 0.0
        %v1077 = vmin.f32 %v1023, 0.0
        %v1078 = vmin.f32 %v1025, 0.0
        %v1079 = vmin.f32 %v1029, 0.0
        %v1080 = vmin.f32 %v1031, 0.0
        %v1081 = vmin.f32 %v1035, 0.0
        %v1082 = vmin.f32 %v1037, 0.0
        %v1083 = vmin.f32 %v1041, 0.0
        %v1084 = vmin.f32 %v1043, 0.0
        %v1085 = vmin.f32 %v1047, 0.0
        %v1086 = vmin.f32 %v1049, 0.0
        %v1087 = vmin.f32 %v1053, 0.0
        %v1088 = vmin.f32 %v1055, 0.0
        %v1089 = vmul.f32 %v1073, 1.442695
        %v1090 = vpow.pop %v1089
        %v1091 = vmul.f32 %v1074, 1.442695
        %v1092 = vpow.pop %v1091
        %v1093 = vmul.f32 %v1075, 1.442695
        %v1094 = vpow.pop %v1093
        %v1095 = vmul.f32 %v1076, 1.442695
        %v1096 = vpow.pop %v1095
        %v1097 = vmul.f32 %v1077, 1.442695
        %v1098 = vpow.pop %v1097
        %v1099 = vmul.f32 %v1078, 1.442695
        %v1100 = vpow.pop %v1099
        %v1101 = vmul.f32 %v1079, 1.442695
        %v1102 = vpow.pop %v1101
        %v1103 = vmul.f32 %v1080, 1.442695
        %v1104 = vpow.pop %v1103
        %v1105 = vmul.f32 %v1081, 1.442695
        %v1106 = vpow.pop %v1105
        %v1107 = vmul.f32 %v1082, 1.442695
        %v1108 = vpow.pop %v1107
        %v1109 = vmul.f32 %v1083, 1.442695
        %v1110 = vpow.pop %v1109
        %v1111 = vmul.f32 %v1084, 1.442695
        %v1112 = vpow.pop %v1111
        %v1113 = vmul.f32 %v1085, 1.442695
        %v1114 = vpow.pop %v1113
        %v1115 = vmul.f32 %v1086, 1.442695
        %v1116 = vpow.pop %v1115
        %v1117 = vmul.f32 %v1087, 1.442695
        %v1118 = vpow.pop %v1117
        %v1119 = vmul.f32 %v1088, 1.442695
        %v1120 = vpow.pop %v1119
        %v1121 = vsub.f32 %v1090, 1.0
        %v1122 = vsub.f32 %v1092, 1.0
        %v1123 = vsub.f32 %v1094, 1.0
        %v1124 = vsub.f32 %v1096, 1.0
        %v1125 = vsub.f32 %v1098, 1.0
        %v1126 = vsub.f32 %v1100, 1.0
        %v1127 = vsub.f32 %v1102, 1.0
        %v1128 = vsub.f32 %v1104, 1.0
        %v1129 = vsub.f32 %v1106, 1.0
        %v1130 = vsub.f32 %v1108, 1.0
        %v1131 = vsub.f32 %v1110, 1.0
        %v1132 = vsub.f32 %v1112, 1.0
        %v1133 = vsub.f32 %v1114, 1.0
        %v1134 = vsub.f32 %v1116, 1.0
        %v1135 = vsub.f32 %v1118, 1.0
        %v1136 = vsub.f32 %v1120, 1.0
        %v1137 = vsel %vm1057, %v1011, %v1121
        %v1138 = vsel %vm1058, %v1013, %v1122
        %v1139 = vsel %vm1059, %v1017, %v1123
        %v1140 = vsel %vm1060, %v1019, %v1124
        %v1141 = vsel %vm1061, %v1023, %v1125
        %v1142 = vsel %vm1062, %v1025, %v1126
        %v1143 = vsel %vm1063, %v1029, %v1127
        %v1144 = vsel %vm1064, %v1031, %v1128
        %v1145 = vsel %vm1065, %v1035, %v1129
        %v1146 = vsel %vm1066, %v1037, %v1130
        %v1147 = vsel %vm1067, %v1041, %v1131
        %v1148 = vsel %vm1068, %v1043, %v1132
        %v1149 = vsel %vm1069, %v1047, %v1133
        %v1150 = vsel %vm1070, %v1049, %v1134
        %v1151 = vsel %vm1071, %v1053, %v1135
        %v1152 = vsel %vm1072, %v1055, %v1136
        %v1153 = vld [vmem:[%s8] sm:$0xff]
        %v1154 = vld [vmem:[%s9] sm:$0xff]
        %1156 = vset.pattern.permute.xlu0 0
        %1157 = vperm.xlu0 %1156, %v1154
        %v1158 = vpop.permute.xlu0 %1157
        %vm1160 = vcmask 523264
        %v1162 = vsel %vm1160, %v1153, 0
        %1164 = vmatprep.subr.mxu0 %v1138
        %1165 = vmatpush1.msra.mxu0 %v1137
        %1166 = vmatprep.subr.mxu0 %v1140
        %1167 = vmatpush1.msra.mxu0 %v1139
        %1168 = vmatprep.subr.mxu0 %v1142
        %1169 = vmatpush1.msra.mxu0 %v1141
        %1170 = vmatprep.subr.mxu0 %v1144
        %1171 = vmatpush1.msra.mxu0 %v1143
        %1172 = vmatprep.subr.mxu0 %v1146
        %1173 = vmatpush1.msra.mxu0 %v1145
        %1174 = vmatprep.subr.mxu0 %v1148
        %1175 = vmatpush1.msra.mxu0 %v1147
        %1176 = vmatprep.subr.mxu0 %v1150
        %1177 = vmatpush1.msra.mxu0 %v1149
        %1178 = vmatprep.subr.mxu0 %v1152
        %1179 = vmatpush1.msra.mxu0 %v1151
        %1180 = vmatprep.subr.mxu0 0.0
        %1181 = vmatpush1.msra.mxu0 0.0
        %1182 = vmatprep.subr.mxu0 0.0
        %1183 = vmatpush1.msra.mxu0 0.0
        %1184 = vmatprep.subr.mxu0 0.0
        %1185 = vmatpush1.msra.mxu0 0.0
        %1186 = vmatprep.subr.mxu0 0.0
        %1187 = vmatpush1.msra.mxu0 0.0
        %1188 = vmatprep.subr.mxu0 0.0
        %1189 = vmatpush1.msra.mxu0 0.0
        %1190 = vmatprep.subr.mxu0 0.0
        %1191 = vmatpush1.msra.mxu0 0.0
        %1192 = vmatprep.subr.mxu0 0.0
        %1193 = vmatpush1.msra.mxu0 0.0
        %1194 = vmatprep.subr.mxu0 0.0
        %1195 = vmatpush1.msra.mxu0 0.0
        %1196 = vmatprep.subr.mxu0 0.0
        %1197 = vmatpush1.msra.mxu0 0.0
        %1198 = vmatprep.subr.mxu0 0.0
        %1199 = vmatpush1.msra.mxu0 0.0
        %1200 = vmatprep.subr.mxu0 0.0
        %1201 = vmatpush1.msra.mxu0 0.0
        %1202 = vmatprep.subr.mxu0 0.0
        %1203 = vmatpush1.msra.mxu0 0.0
        %1204 = vmatprep.subr.mxu0 0.0
        %1205 = vmatpush1.msra.mxu0 0.0
        %1206 = vmatprep.subr.mxu0 0.0
        %1207 = vmatpush1.msra.mxu0 0.0
        %1208 = vmatprep.subr.mxu0 0.0
        %1209 = vmatpush1.msra.mxu0 0.0
        %1210 = vmatprep.subr.mxu0 0.0
        %1211 = vmatpush1.msra.mxu0 0.0
        %1212 = vmatprep.subr.mxu0 0.0
        %1213 = vmatpush1.msra.mxu0 0.0
        %1214 = vmatprep.subr.mxu0 0.0
        %1215 = vmatpush1.msra.mxu0 0.0
        %1216 = vmatprep.subr.mxu0 0.0
        %1217 = vmatpush1.msra.mxu0 0.0
        %1218 = vmatprep.subr.mxu0 0.0
        %1219 = vmatpush1.msra.mxu0 0.0
        %1220 = vmatprep.subr.mxu0 0.0
        %1221 = vmatpush1.msra.mxu0 0.0
        %1222 = vmatprep.subr.mxu0 0.0
        %1223 = vmatpush1.msra.mxu0 0.0
        %1224 = vmatprep.subr.mxu0 0.0
        %1225 = vmatpush1.msra.mxu0 0.0
        %1226 = vmatprep.subr.mxu0 0.0
        %1227 = vmatpush1.msra.mxu0 0.0
        %1228 = vmatprep.mubr.f32.mxu0 0.0
        %1229 = vmatmul.mubr.f32.gmra.mrb[0].mxu0 %v1162
        %v1230 = vpop.f32.mrb[0].mxu0
        %v1231 = vadd.f32 %v1158, %v1230
        %v1232 = vpop.f32.mrb[0].mxu0
        %v1233 = vadd.f32 %v1158, %v1232
        %1234 = vdwg.mxu0
        %v1237 = vrot.slane %v1231, 7
        %v1238 = vrot.slane %v1233, 7
        %v1241 = vsub.f32 %v1231, %v1237
        %v1242 = vsub.f32 %v1233, %v1238
        %v1245 = vcombine.low %v1241, %v1242
        %v1247 = vunpack.c.l.s4 1966171168
        %v1248 = vunpack.c.0.s8 %v1247
        %v1249 = vlaneseq
        %v1250 = vshrl.u32 %v1249, 7
        %v1251 = vsub.s32 %v1248, %v1250
        %v1252 = vrot.slane %v1245, %v1251
        %v1253 = vcombine.high %v1252, %v1252
        %v1255 = vunpack.c.l.s4 1966171168
        %v1256 = vunpack.c.0.s8 %v1255
        %v1257 = vlaneseq
        %v1258 = vshrl.u32 %v1257, 7
        %v1259 = vsub.s32 %v1256, %v1258
        %v1260 = vrot.slane %v1253, %v1259
        %v1262 = vmul.f32 %v411, %v1260
        %v1264 = vlaneseq
        %v1265 = vshrl.u32 %v1264, 7
        %v1266 = vsub.s32 0, %v1265
        %v1267 = vrot.slane %v1262, %v1266
        %v1268 = vlaneseq
        %v1269 = vshrl.u32 %v1268, 7
        %v1270 = vsub.s32 1, %v1269
        %v1271 = vrot.slane %v1262, %v1270
        %v1274 = vadd.f32 %v1231, %v1267
        %v1275 = vadd.f32 %v1233, %v1271
        %v1278 = vcombine.low %v1274, %v1275
        %v1280 = vunpack.c.l.s4 1966171168
        %v1281 = vunpack.c.0.s8 %v1280
        %v1282 = vlaneseq
        %v1283 = vshrl.u32 %v1282, 7
        %v1284 = vsub.s32 %v1281, %v1283
        %v1285 = vrot.slane %v1278, %v1284
        %v1287 = vunpack.c.l.s4 1966171168
        %v1288 = vunpack.c.0.s8 %v1287
        %v1289 = vlaneseq
        %v1290 = vshrl.u32 %v1289, 7
        %v1291 = vsub.s32 %v1288, %v1290
        %v1292 = vrot.slane %v1285, %v1291
        %v1294 = vlaneseq
        %vm1295 = vcmp.ge.s32.totalorder %v1294, 0
        %vm1296 = vcmp.lt.s32.totalorder %v1294, 256
        %vm1297 = vmand %vm1295, %vm1296
        %1298 = vst.msk [vmem:[%s367] sm:$0x3] %vm1297, %v1292
        %s1299 = sand.u32 %s252, 1
        %s1300 = scalar_lea.sflag [#allocation3], %s1299
        %s1301 = sand.u32 %s252, 1
        %s1302 = smul.addr %s1301, 2
        %s1303 = scalar_lea.vmem [#allocation2], %s1302
        // Predicated region
        $region61: #{tpu_custom_call.1} parent=59 // pred_check
          %p1304 = pneg %p262
        $region62: #{tpu_custom_call.1} parent=59 // pred_check_branch
          %1306 = sbr.rel (%p1304) target = $region64
        $region63: #{tpu_custom_call.1} parent=59 // pred_region
          %s1308 = ssub.s32 32, 32
          %1309 = vsyncadd %s1300, %s1308
          %s1310 = smul.addr %s24, 2
          %s1311 = smul.addr %s1310, 16
          %s1312 = scalar_lea.hbm %s10, %s1311
          %s1314 = sshll.u32 %s1303, 4
          %s1315 = int_to_ptr.vmem [resolvable:$true] %s1314
          %1317 = dma.vmem_to_hbm [thread:$0]  %s1315, 32, %s1312, %s1300
        $region64: #{tpu_custom_call.1} parent=59 // pred_fallthru
          _
      $region60: #{tpu_custom_call.1} parent=5 // pred_fallthru
        _
      %p1318 = scmp.le.s32.totalorder 2, %s19
      // Predicated region
      $region65: #{tpu_custom_call.1} parent=5 // pred_check
        %p1319 = pneg %p1318
      $region66: #{tpu_custom_call.1} parent=5 // pred_check_branch
        %1321 = sbr.rel (%p1319) target = $region68
      $region67: #{tpu_custom_call.1} parent=5 // pred_region
        %s1322 = ssub.s32 %s19, 2
        // Predicated region
        $region69: #{tpu_custom_call.1} parent=67 // pred_check
          %p1323 = pneg %p268
        $region70: #{tpu_custom_call.1} parent=67 // pred_check_branch
          %1325 = sbr.rel (%p1323) target = $region72
        $region71: #{tpu_custom_call.1} parent=67 // pred_region
          %s1326 = sand.u32 %s253, 1
          %s1327 = scalar_lea.sflag [#allocation3], %s1326
          %s1328 = sand.u32 %s253, 1
          %s1329 = smul.addr %s1328, 2
          %s1330 = scalar_lea.vmem [#allocation2], %s1329
          %1331 = dma.done %s1327, 32
        $region72: #{tpu_custom_call.1} parent=67 // pred_fallthru
          _
      $region68: #{tpu_custom_call.1} parent=5 // pred_fallthru
        _
    $region6: #{tpu_custom_call.1} parent=1 // loop_footer
      %s23 = sadd.s32 1, %s19
    $region7: #{tpu_custom_call.1} parent=1 // loop_footer_branch
      %18 = sbr.rel target = $region3
    $region8: #{tpu_custom_call.1} parent=1 // loop_exit
      _
    %1332 = vsyncpa [#allocation3], 1
    %s1333 = scalar_lea.sflag [#allocation3], 1
    %1334 = vsyncpa %s1333, 1

</llo_original>
